<compile_context>
chip_gen: v5e
topology: v5e:2x2
jax: 0.10.0
libtpu: 0.0.40
codegen_flags: <defaults>
</compile_context>

<pallas_src>
import functools

import jax
import jax.numpy as jnp
from jax import lax
from jax.experimental import pallas as pl
from jax.experimental.pallas import tpu as pltpu


def _divisor_chunk(total, target):
    """Largest divisor of `total` that is <= target (>=1)."""
    c = min(total, target)
    while total % c:
        c -= 1
    return c


def _sigmoid(x):
    # Single EUP transcendental instead of exp + reciprocal.
    return 0.5 * jnp.tanh(0.5 * x) + 0.5


# -----------------------------------------------------------------------------
# Tiled matmul + bias kernel: (M, K) @ (K, N) + bias  (bf16 operands, f32 accum)
# Used for the hoisted LSTM input projection and for the decoder Linear.
# -----------------------------------------------------------------------------
def _matmul_bias_kernel(x_ref, w_ref, b_ref, o_ref):
    acc = jnp.dot(x_ref[...], w_ref[...], preferred_element_type=jnp.float32)
    o_ref[...] = (acc + b_ref[...]).astype(o_ref.dtype)


def matmul_bias(x, w_t, bias, *, tm_target=256, tn_target=512):
    """x: (M, K) f32; w_t: (K, N) f32; bias: (N,) f32 -> (M, N) f32."""
    M, K = x.shape
    N = w_t.shape[1]
    # Full-dim block if small, else an (8,128)-aligned tile (partial last block OK).
    tm = M if M <= tm_target else max(8, (tm_target // 8) * 8)
    tn = N if N <= tn_target else max(128, (tn_target // 128) * 128)
    grid = (pl.cdiv(M, tm), pl.cdiv(N, tn))

    x_b = x.astype(jnp.bfloat16)
    w_b = w_t.astype(jnp.bfloat16)
    b2d = bias.reshape(1, N).astype(jnp.float32)

    return pl.pallas_call(
        _matmul_bias_kernel,
        out_shape=jax.ShapeDtypeStruct((M, N), jnp.float32),
        grid_spec=pltpu.PrefetchScalarGridSpec(
            num_scalar_prefetch=0,
            grid=grid,
            in_specs=[
                pl.BlockSpec((tm, K), lambda i, j: (i, 0)),     # x row tile
                pl.BlockSpec((K, tn), lambda i, j: (0, j)),     # weight col tile
                pl.BlockSpec((1, tn), lambda i, j: (0, j)),     # bias col tile
            ],
            out_specs=pl.BlockSpec((tm, tn), lambda i, j: (i, j)),
        ),
        compiler_params=pltpu.CompilerParams(
            dimension_semantics=("parallel", "parallel"),
            vmem_limit_bytes=64 * 1024 * 1024),
    )(x_b, w_b, b2d)


# -----------------------------------------------------------------------------
# LSTM layer kernel: recurrence only (input projection already folded into
# pre_gates).  grid = (batch_chunks [parallel], time_chunks [arbitrary]);
# the time scan inside each chunk is an unrolled lax.fori_loop with the h/c
# carry held in VMEM scratch across time chunks.
# -----------------------------------------------------------------------------
def _lstm_scan_kernel(pg_ref, h0_ref, c0_ref, whh_ref,
                      out_ref, hT_ref, cT_ref,
                      h_scr, c_scr, *, nhid, t_chunk):
    tc = pl.program_id(1)

    @pl.when(tc == 0)
    def _init():
        h_scr[...] = h0_ref[...]
        c_scr[...] = c0_ref[...]

    whh = whh_ref[...]  # (H, 4H) bf16, resident for the whole chunk

    def step(i, carry):
        h = h_scr[...]
        c = c_scr[...]
        # Single MXU push per step: (B, H) @ (H, 4H); pre-gates carry x@W_ih^T + bias.
        gates = (jnp.dot(h.astype(jnp.bfloat16), whh,
                         preferred_element_type=jnp.float32)
                 + pg_ref[i])                                  # (B, 4H), f32
        # PyTorch gate order: i, f, g, o.  (Lane-aligned slices when nhid % 128 == 0.)
        i_g = _sigmoid(gates[:, 0 * nhid:1 * nhid])
        f_g = _sigmoid(gates[:, 1 * nhid:2 * nhid])
        g_g = jnp.tanh(gates[:, 2 * nhid:3 * nhid])
        o_g = _sigmoid(gates[:, 3 * nhid:4 * nhid])

        c_new = f_g * c + i_g * g_g
        h_new = o_g * jnp.tanh(c_new)

        c_scr[...] = c_new
        h_scr[...] = h_new
        out_ref[i] = h_new
        return carry

    lax.fori_loop(0, t_chunk, step, 0, unroll=True)

    # Only the last time chunk writes the final state (avoids per-step stores).
    @pl.when(tc == pl.num_programs(1) - 1)
    def _final():
        hT_ref[...] = h_scr[...]
        cT_ref[...] = c_scr[...]


def lstm_layer(pre_gates, h0, c0, w_hh):
    """pre_gates: (T, B, 4H) f32 (= x@W_ih^T + b_ih + b_hh); h0/c0: (B, H); w_hh: (4H, H)."""
    T, B, four_h = pre_gates.shape
    nhid = four_h // 4
    whh_t = jnp.asarray(w_hh.T, jnp.float32).astype(jnp.bfloat16)   # (H, 4H)

    t_chunk = _divisor_chunk(T, 16)          # chunk of timesteps per grid step
    nt = T // t_chunk
    b_chunk = B // 2 if (B % 16 == 0) else B  # optional parallel batch split (v7x 2 TCs)
    nb = B // b_chunk

    kernel = functools.partial(_lstm_scan_kernel, nhid=nhid, t_chunk=t_chunk)
    out, hT, cT = pl.pallas_call(
        kernel,
        out_shape=(
            jax.ShapeDtypeStruct((T, B, nhid), jnp.float32),
            jax.ShapeDtypeStruct((B, nhid), jnp.float32),
            jax.ShapeDtypeStruct((B, nhid), jnp.float32),
        ),
        grid_spec=pltpu.PrefetchScalarGridSpec(
            num_scalar_prefetch=0,
            grid=(nb, nt),
            in_specs=[
                pl.BlockSpec((t_chunk, b_chunk, 4 * nhid), lambda b, t: (t, b, 0)),  # pre-gates
                pl.BlockSpec((b_chunk, nhid), lambda b, t: (b, 0)),                  # h0
                pl.BlockSpec((b_chunk, nhid), lambda b, t: (b, 0)),                  # c0
                pl.BlockSpec((nhid, 4 * nhid), lambda b, t: (0, 0)),                 # W_hh^T
            ],
            out_specs=[
                pl.BlockSpec((t_chunk, b_chunk, nhid), lambda b, t: (t, b, 0)),      # out
                pl.BlockSpec((b_chunk, nhid), lambda b, t: (b, 0)),                  # h_T
                pl.BlockSpec((b_chunk, nhid), lambda b, t: (b, 0)),                  # c_T
            ],
            scratch_shapes=[
                pltpu.VMEM((b_chunk, nhid), jnp.float32),   # h carry
                pltpu.VMEM((b_chunk, nhid), jnp.float32),   # c carry
            ],
        ),
        compiler_params=pltpu.CompilerParams(
            dimension_semantics=("parallel", "arbitrary"),
            vmem_limit_bytes=64 * 1024 * 1024),
    )(pre_gates, h0, c0, whh_t)
    return out, hT, cT


# -----------------------------------------------------------------------------
# Full model forward (LSTM variant), mirroring RNNPMBModel.forward.
# -----------------------------------------------------------------------------
def rnn_model_forward(params, tokens, hidden):
    """tokens: (T, B) int32; hidden: (h0, c0) each (nlayers, B, nhid)."""
    enc_w = params["encoder_weight"]                 # (ntoken, ninp) -- preembed copy
    emb = enc_w[tokens]                              # embedding gather (glue, plain JAX)
    # Dropout == identity (eval mode).
    T, B, _ = emb.shape
    h0, c0 = hidden

    x = emb
    h_out, c_out = [], []
    for layer in range(params["nlayers"]):
        lw = params["lstm"][layer]
        in_dim = x.shape[-1]
        # Hoisted input projection: one big (T*B, in_dim) @ (in_dim, 4H) matmul.
        pre = matmul_bias(x.reshape(T * B, in_dim),
                          jnp.asarray(lw["w_ih"].T, jnp.float32),
                          lw["b_ih"] + lw["b_hh"])
        pre = pre.reshape(T, B, -1)
        x, hT, cT = lstm_layer(pre, h0[layer], c0[layer], lw["w_hh"])
        h_out.append(hT)
        c_out.append(cT)

    nhid = x.shape[-1]
    dec = matmul_bias(x.reshape(T * B, nhid),
                      jnp.asarray(params["decoder_weight"].T, jnp.float32),
                      params["decoder_bias"])
    ntoken = dec.shape[-1]
    return dec.reshape(T, B, ntoken), (jnp.stack(h_out), jnp.stack(c_out))


# -----------------------------------------------------------------------------
# Deterministic parameter init (encoder weight doubles as the `preembed` copy).
# -----------------------------------------------------------------------------
def init_params(key, ntoken, ninp, nhid, nlayers):
    initrange = 0.1
    stdv = 1.0 / jnp.sqrt(jnp.float32(nhid))
    keys = jax.random.split(key, 2 + 4 * nlayers)
    params = {
        "encoder_weight": jax.random.uniform(
            keys[0], (ntoken, ninp), jnp.float32, -initrange, initrange),
        "decoder_weight": jax.random.uniform(
            keys[1], (ntoken, nhid), jnp.float32, -initrange, initrange),
        "decoder_bias": jnp.zeros((ntoken,), jnp.float32),
        "lstm": [],
        "nlayers": nlayers,
    }
    for layer in range(nlayers):
        in_dim = ninp if layer == 0 else nhid
        k = keys[2 + 4 * layer: 2 + 4 * (layer + 1)]
        params["lstm"].append({
            "w_ih": jax.random.uniform(k[0], (4 * nhid, in_dim), jnp.float32, -stdv, stdv),
            "w_hh": jax.random.uniform(k[1], (4 * nhid, nhid), jnp.float32, -stdv, stdv),
            "b_ih": jax.random.uniform(k[2], (4 * nhid,), jnp.float32, -stdv, stdv),
            "b_hh": jax.random.uniform(k[3], (4 * nhid,), jnp.float32, -stdv, stdv),
        })
    return params


if __name__ == "__main__":
    ntoken, ninp, nhid, nlayers = 128, 32, 32, 2
    T, B = 8, 4

    key = jax.random.PRNGKey(0)
    pkey, tkey = jax.random.split(key)
    params = init_params(pkey, ntoken, ninp, nhid, nlayers)

    tokens = jax.random.randint(tkey, (T, B), 0, ntoken, dtype=jnp.int32)
    hidden = (jnp.zeros((nlayers, B, nhid), jnp.float32),
              jnp.zeros((nlayers, B, nhid), jnp.float32))

    decoded, (hT, cT) = rnn_model_forward(params, tokens, hidden)
    jax.block_until_ready((decoded, hT, cT))

    assert decoded.shape == (T, B, ntoken)
    assert hT.shape == (nlayers, B, nhid) and cT.shape == (nlayers, B, nhid)
    assert bool(jnp.all(jnp.isfinite(decoded)))
    print("KERNEL_OK")
</pallas_src>

<mosaic_0001>
module attributes {stable_mosaic.version = 11 : i64} {
  func.func @_matmul_bias_kernel(%arg0: i32, %arg1: i32, %arg2: memref<32x32xbf16, #tpu.memory_space<vmem>>, %arg3: memref<32x128xbf16, #tpu.memory_space<vmem>>, %arg4: memref<1x128xf32, #tpu.memory_space<vmem>>, %arg5: memref<32x128xf32, #tpu.memory_space<vmem>>) attributes {dimension_semantics = [#tpu.dimension_semantics<parallel>, #tpu.dimension_semantics<parallel>], iteration_bounds = array<i64: 1, 1>, scalar_prefetch = 0 : i64, scratch_operands = 0 : i64, tpu.core_type = #tpu.core_type<tc>, window_params = [{transform_indices = @transform_0, window_bounds = array<i64: 32, 32>}, {transform_indices = @transform_1, window_bounds = array<i64: 32, 128>}, {transform_indices = @transform_2, window_bounds = array<i64: 1, 128>}, {transform_indices = @transform_3, window_bounds = array<i64: 32, 128>}]} {
    %c0 = arith.constant 0 : index
    %c0_0 = arith.constant 0 : index
    %0 = vector.load %arg2[%c0, %c0_0] : memref<32x32xbf16, #tpu.memory_space<vmem>>, vector<32x32xbf16>
    %c0_1 = arith.constant 0 : index
    %c0_2 = arith.constant 0 : index
    %1 = vector.load %arg3[%c0_1, %c0_2] : memref<32x128xbf16, #tpu.memory_space<vmem>>, vector<32x128xbf16>
    %cst = arith.constant dense<0.000000e+00> : vector<32x128xf32>
    %2 = tpu.matmul %0, %1, %cst {dimension_numbers = #tpu.dot_dimension_numbers<[1], [0], [0], [1], [0, 0, 1, 1], [], []>} : vector<32x32xbf16>, vector<32x128xbf16>, vector<32x128xf32> -> vector<32x128xf32>
    %c0_3 = arith.constant 0 : index
    %c0_4 = arith.constant 0 : index
    %3 = vector.load %arg4[%c0_3, %c0_4] : memref<1x128xf32, #tpu.memory_space<vmem>>, vector<1x128xf32>
    %4 = vector.broadcast %3 : vector<1x128xf32> to vector<32x128xf32>
    %5 = arith.addf %2, %4 : vector<32x128xf32>
    %c0_5 = arith.constant 0 : index
    %c0_6 = arith.constant 0 : index
    %6 = vector.load %arg5[%c0_5, %c0_6] : memref<32x128xf32, #tpu.memory_space<vmem>>, vector<32x128xf32>
    tpu.vector_store %arg5[%c0_5, %c0_6], %5 {strides = array<i32>} : memref<32x128xf32, #tpu.memory_space<vmem>>, vector<32x128xf32>,
    return
  }
  func.func @transform_0(%arg0: i32, %arg1: i32) -> (i32, i32) {
    %c0_i32 = arith.constant 0 : i32
    %c0_i32_0 = arith.constant 0 : i32
    return %arg0, %c0_i32 : i32, i32
  }
  func.func @transform_1(%arg0: i32, %arg1: i32) -> (i32, i32) {
    %c0_i32 = arith.constant 0 : i32
    %c0_i32_0 = arith.constant 0 : i32
    return %c0_i32, %arg1 : i32, i32
  }
  func.func @transform_2(%arg0: i32, %arg1: i32) -> (i32, i32) {
    %c0_i32 = arith.constant 0 : i32
    %c0_i32_0 = arith.constant 0 : i32
    return %c0_i32, %arg1 : i32, i32
  }
  func.func @transform_3(%arg0: i32, %arg1: i32) -> (i32, i32) {
    %c0_i32 = arith.constant 0 : i32
    return %arg0, %arg1 : i32, i32
  }
}

</mosaic_0001>

<llo_original>
// kernel: tpu_custom_call.1
$region0: #{tpu_custom_call.1}
  #allocation0 [shape = 'u32[]', space=smem, size = 0x4, offset = 0x4, fixed_abs, tag = 'smem constant byte address 0x4 - core index']
  #allocation1 [shape = 'u32[72,128]{1,0:T(1,128)}', space=vmem, size = 0x9000, scoped, tag = 'internal scratch']
  %s0 = inlined_call_operand.hbm [shape: bf16[32,32], index: 0, kind: input, shape index: {}]
  %s1 = inlined_call_operand.hbm [shape: bf16[32,128], index: 1, kind: input, shape index: {}]
  %s2 = inlined_call_operand.vmem [shape: f32[1,128], index: 2, kind: input, shape index: {}]
  %s3 = inlined_call_operand.hbm [shape: f32[32,128], index: 3, kind: output, shape index: {}]
  %s4 = sld [smem:[#allocation0]]
  $region30: #{tpu_custom_call.1} parent=0
    _
  %s6 = ssub.s32 1, %s4
  %s7 = scalar_select 0, %s6, %s4
  $region1: #{tpu_custom_call.1} parent=0
    #allocation2 [shape = 'u8[8192]{0}', space=vmem, size = 0x2000, scoped, tag = 'input window, operand 0, single buffered']
    #allocation3 [shape = 's32[1]{0}', space=sflag, size = 0x4, scoped, tag = 'scoped memory for tpu_custom_call.1']
    #allocation4 [shape = 's32[1]{0}', space=sflag, size = 0x4, scoped, tag = 'scoped memory for tpu_custom_call.1']
    #allocation5 [shape = 'u8[8192]{0}', space=vmem, size = 0x2000, scoped, tag = 'input window, operand 1, single buffered']
    #allocation6 [shape = 's32[1]{0}', space=sflag, size = 0x4, scoped, tag = 'scoped memory for tpu_custom_call.1']
    #allocation7 [shape = 'u8[16384]{0}', space=vmem, size = 0x4000, scoped, tag = 'output window, operand 0, single buffered']
    %8 = vsyncpa [#allocation3], 0
    %9 = vsyncpa [#allocation6], 0
    %10 = vsyncpa [#allocation4], 0
    // Predicated region
    $region2: #{tpu_custom_call.1} parent=1 // pred_check
      _
    $region3: #{tpu_custom_call.1} parent=1 // pred_check_branch
      %12 = sbr.rel (0) target = $region5
    $region4: #{tpu_custom_call.1} parent=1 // pred_region
      %14 = vsyncadd [#allocation3], 0
      %s15 = sshll.u32 %s0, 4
      %s16 = int_to_ptr.hbm [resolvable:$true] %s15
      %s17 = sshll.u32 [#allocation2], 4
      %s18 = int_to_ptr.vmem [resolvable:$true] %s17
      %23 = dma.hbm_to_vmem [thread:$0]  %s16, 256, %s18, [#allocation3], 64, 64, 4
    $region5: #{tpu_custom_call.1} parent=1 // pred_fallthru
      _
    // Predicated region
    $region6: #{tpu_custom_call.1} parent=1 // pred_check
      _
    $region7: #{tpu_custom_call.1} parent=1 // pred_check_branch
      %25 = sbr.rel (0) target = $region9
    $region8: #{tpu_custom_call.1} parent=1 // pred_region
      %27 = vsyncadd [#allocation6], 0
      %s28 = sshll.u32 %s1, 4
      %s29 = int_to_ptr.hbm [resolvable:$true] %s28
      %s30 = sshll.u32 [#allocation5], 4
      %s31 = int_to_ptr.vmem [resolvable:$true] %s30
      %36 = dma.hbm_to_vmem [thread:$0]  %s29, 256, %s31, [#allocation6], 64, 64, 4
    $region9: #{tpu_custom_call.1} parent=1 // pred_fallthru
      _
    // Predicated region
    $region10: #{tpu_custom_call.1} parent=1 // pred_check
      _
    $region11: #{tpu_custom_call.1} parent=1 // pred_check_branch
      %38 = sbr.rel (0) target = $region13
    $region12: #{tpu_custom_call.1} parent=1 // pred_region
      _
    $region13: #{tpu_custom_call.1} parent=1 // pred_fallthru
      _
    // Predicated region
    $region14: #{tpu_custom_call.1} parent=1 // pred_check
      _
    $region15: #{tpu_custom_call.1} parent=1 // pred_check_branch
      %40 = sbr.rel (0) target = $region17
    $region16: #{tpu_custom_call.1} parent=1 // pred_region
      %42 = dma.done [#allocation3], 256
    $region17: #{tpu_custom_call.1} parent=1 // pred_fallthru
      _
    // Predicated region
    $region18: #{tpu_custom_call.1} parent=1 // pred_check
      _
    $region19: #{tpu_custom_call.1} parent=1 // pred_check_branch
      %44 = sbr.rel (0) target = $region21
    $region20: #{tpu_custom_call.1} parent=1 // pred_region
      %46 = dma.done [#allocation6], 256
    $region21: #{tpu_custom_call.1} parent=1 // pred_fallthru
      _
    %v48 = vld [vmem:[#allocation2] sm:$0xf]
    %v49 = vld [vmem:[#allocation2 + $0x4] sm:$0xf]
    %v50 = vld [vmem:[#allocation2 + $0x8] sm:$0xf]
    %v51 = vld [vmem:[#allocation2 + $0xc] sm:$0xf]
    %v52 = vld [vmem:[#allocation5] sm:$0xf]
    %v53 = vld [vmem:[#allocation5 + $0x4] sm:$0xf]
    %v54 = vld [vmem:[#allocation5 + $0x8] sm:$0xf]
    %v55 = vld [vmem:[#allocation5 + $0xc] sm:$0xf]
    %v56 = vld [vmem:[%s2] sm:$0x1]
    %v58 = vperm.slane %v56, 0
    %v64 = vunpack.c.l.b16 %v48
    %v65 = vunpack.c.l.b16 %v49
    %v66 = vunpack.c.l.b16 %v50
    %v67 = vunpack.c.l.b16 %v51
    %v68 = vpack.c.b16 %v65, %v64
    %v69 = vpack.c.b16 %v67, %v66
    %v74 = vunpack.c.l.b16 %v52
    %v75 = vunpack.c.l.b16 %v53
    %v76 = vunpack.c.l.b16 %v54
    %v77 = vunpack.c.l.b16 %v55
    %v78 = vpack.c.b16 %v75, %v74
    %v79 = vpack.c.b16 %v77, %v76
    %vm82 = vcmask 261120
    %v84 = vsel %vm82, %v68, 0
    %v87 = vsel %vm82, %v69, 0
    %89 = vmatpush.bf16.msra.mxu0 0
    %90 = vmatpush.bf16.msra.mxu0 0
    %91 = vmatpush.bf16.msra.mxu0 0
    %92 = vmatpush.bf16.msra.mxu0 0
    %93 = vmatpush.bf16.msra.mxu0 0
    %94 = vmatpush.bf16.msra.mxu0 0
    %95 = vmatpush.bf16.msra.mxu0 %v79
    %96 = vmatpush.bf16.msra.mxu0 %v78
    %97 = vmatmul.bf16.gmra.mxu0 %v84
    %v98 = vpop.f32.mrf.mxu0
    %v99 = vadd.f32 %v58, %v98
    %v100 = vpop.f32.mrf.mxu0
    %v101 = vadd.f32 %v58, %v100
    %102 = vmatmul.bf16.gmra.mxu0 %v87
    %v103 = vpop.f32.mrf.mxu0
    %v104 = vadd.f32 %v58, %v103
    %v105 = vpop.f32.mrf.mxu0
    %v106 = vadd.f32 %v58, %v105
    %107 = vdwg.mxu0
    %108 = vst [vmem:[#allocation7] sm:$0xff] %v99
    %109 = vst [vmem:[#allocation7 + $0x8] sm:$0xff] %v101
    %110 = vst [vmem:[#allocation7 + $0x10] sm:$0xff] %v104
    %111 = vst [vmem:[#allocation7 + $0x18] sm:$0xff] %v106
    // Predicated region
    $region22: #{tpu_custom_call.1} parent=1 // pred_check
      _
    $region23: #{tpu_custom_call.1} parent=1 // pred_check_branch
      %113 = sbr.rel (0) target = $region25
    $region24: #{tpu_custom_call.1} parent=1 // pred_region
      %115 = vsyncadd [#allocation4], 0
      %s116 = sshll.u32 [#allocation7], 4
      %s117 = int_to_ptr.vmem [resolvable:$true] %s116
      %s118 = sshll.u32 %s3, 4
      %s119 = int_to_ptr.hbm [resolvable:$true] %s118
      %124 = dma.vmem_to_hbm [thread:$0]  %s117, 512, %s119, [#allocation4], 128, 128, 8
    $region25: #{tpu_custom_call.1} parent=1 // pred_fallthru
      _
    // Predicated region
    $region26: #{tpu_custom_call.1} parent=1 // pred_check
      _
    $region27: #{tpu_custom_call.1} parent=1 // pred_check_branch
      %126 = sbr.rel (0) target = $region29
    $region28: #{tpu_custom_call.1} parent=1 // pred_region
      %128 = dma.done [#allocation4], 512
    $region29: #{tpu_custom_call.1} parent=1 // pred_fallthru
      _
    %129 = vsyncpa [#allocation3], 1
    %130 = vsyncpa [#allocation6], 1
    %131 = vsyncpa [#allocation4], 1

</llo_original>
